<compile_context>
chip_gen: v5e
topology: v5e:2x2
jax: 0.10.0
libtpu: 0.0.40
codegen_flags: <defaults>
</compile_context>

<pallas_src>
import jax
import jax.numpy as jnp
from jax.experimental import pallas as pl
from jax.experimental.pallas import tpu as pltpu


def _meta_opt_kernel(w_ref, b_ref, x_ref, o_ref):
    # w_ref: (12,) f32 in SMEM  -- PyTorch (2, 6) weight, row-major flattened.
    # b_ref: (2,)  f32 in SMEM.
    # x_ref: (6, TN) f32 in VMEM -- 6 features on sublanes, N rows on lanes.
    # o_ref: (2, TN) f32 in VMEM -- row 0 = f, row 1 = i.
    for o in range(2):  # 2 outputs, fully unrolled
        y = x_ref[0:1, :] * w_ref[6 * o + 0]
        for k in range(1, 6):  # K = 6, fully unrolled VPU muls/adds
            y = y + x_ref[k:k + 1, :] * w_ref[6 * o + k]
        o_ref[o:o + 1, :] = jax.nn.sigmoid(y + b_ref[o])


def fast_meta_optimizer_forward(x, weight, bias, *, tn=128 * 1024):
    """sigmoid(x @ weight.T + bias), split along axis 1 into (f, i)."""
    n, in_f = x.shape
    out_f, in_f_w = weight.shape
    assert in_f == 6 and out_f == 2 and in_f_w == 6

    # Lane-dense layout: features on the sublane axis, N on the lane axis.
    xt = x.T.astype(jnp.float32)                    # (6, N)
    w_flat = weight.reshape(-1).astype(jnp.float32)  # (12,) row-major (o, k)
    b = bias.astype(jnp.float32)                     # (2,)

    if n <= tn:
        # Single grid step; block == full array, so no 128-alignment / padding
        # is required and no extra HBM pass over x is made.
        block_n = n
        grid = (1,)
    else:
        # TN is a multiple of 128 -> lane-aligned blocks; the ragged tail is
        # handled by Pallas block clipping (no jnp.pad of x).
        block_n = tn
        grid = (pl.cdiv(n, block_n),)

    out = pl.pallas_call(
        _meta_opt_kernel,
        out_shape=jax.ShapeDtypeStruct((2, n), jnp.float32),
        grid_spec=pltpu.PrefetchScalarGridSpec(
            num_scalar_prefetch=2,          # weight + bias -> SMEM scalars
            grid=grid,
            in_specs=[
                pl.BlockSpec((6, block_n), lambda i, w, b: (0, i)),   # x slab
            ],
            out_specs=pl.BlockSpec((2, block_n), lambda i, w, b: (0, i)),
        ),
        compiler_params=pltpu.CompilerParams(
            dimension_semantics=("parallel",),
            vmem_limit_bytes=32 * 1024 * 1024,
        ),
    )(w_flat, b, xt)

    # torch.split(1, 1) along dim=1 -> (f, i), each (N, 1).  Rows of the
    # (2, N) slab are contiguous, so this is just a cheap reshape per output.
    f = out[0].reshape(n, 1)
    i = out[1].reshape(n, 1)
    return f, i


def init_params(key):
    """Deterministic init matching nn.Linear(6, 2) + bias[0] = 1."""
    in_f, out_f = 6, 2
    kw, kb = jax.random.split(key)
    bound = 1.0 / jnp.sqrt(jnp.float32(in_f))
    weight = jax.random.uniform(kw, (out_f, in_f), jnp.float32, -bound, bound)
    bias = jax.random.uniform(kb, (out_f,), jnp.float32, -bound, bound)
    bias = bias.at[0].set(1.0)  # self.linear1.bias.data[0] = 1
    return weight, bias


if __name__ == "__main__":
    key = jax.random.PRNGKey(0)
    k_params, k_x = jax.random.split(key)

    weight, bias = init_params(k_params)

    # N rows of the 6-feature meta-optimizer input
    # (preprocessed grads [2 cols], params, loss, f, i).
    N = 256
    x = jax.random.normal(k_x, (N, 6), jnp.float32)

    f, i = fast_meta_optimizer_forward(x, weight, bias)
    jax.block_until_ready((f, i))

    # Reference check in plain JAX (accumulation order differs from jnp.dot,
    # well within tolerance).
    ref = jax.nn.sigmoid(x @ weight.T + bias)
    ref_f, ref_i = ref[:, 0:1], ref[:, 1:2]
    assert f.shape == (N, 1) and i.shape == (N, 1)
    assert jnp.allclose(f, ref_f, atol=1e-5), "f mismatch"
    assert jnp.allclose(i, ref_i, atol=1e-5), "i mismatch"

    print("KERNEL_OK")
</pallas_src>

<mosaic_0001>
module attributes {stable_mosaic.version = 11 : i64} {
  func.func @_meta_opt_kernel(%arg0: i32, %arg1: memref<12xf32, #tpu.memory_space<smem>>, %arg2: memref<2xf32, #tpu.memory_space<smem>>, %arg3: memref<6x256xf32, #tpu.memory_space<vmem>>, %arg4: memref<2x256xf32, #tpu.memory_space<vmem>>) attributes {dimension_semantics = [#tpu.dimension_semantics<parallel>], iteration_bounds = array<i64: 1>, scalar_prefetch = 2 : i64, scratch_operands = 0 : i64, tpu.core_type = #tpu.core_type<tc>, window_params = [{transform_indices = @transform_0, window_bounds = array<i64: 6, 256>}, {transform_indices = @transform_1, window_bounds = array<i64: 2, 256>}]} {
    %c0 = arith.constant 0 : index
    %c0_0 = arith.constant 0 : index
    %0 = vector.load %arg3[%c0, %c0_0] : memref<6x256xf32, #tpu.memory_space<vmem>>, vector<1x256xf32>
    %c0_1 = arith.constant 0 : index
    %1 = memref.load %arg1[%c0_1] : memref<12xf32, #tpu.memory_space<smem>>
    %2 = vector.broadcast %1 : f32 to vector<1x256xf32>
    %3 = arith.mulf %0, %2 : vector<1x256xf32>
    %c1 = arith.constant 1 : index
    %c0_2 = arith.constant 0 : index
    %4 = vector.load %arg3[%c1, %c0_2] : memref<6x256xf32, #tpu.memory_space<vmem>>, vector<1x256xf32>
    %c1_3 = arith.constant 1 : index
    %5 = memref.load %arg1[%c1_3] : memref<12xf32, #tpu.memory_space<smem>>
    %6 = vector.broadcast %5 : f32 to vector<1x256xf32>
    %7 = arith.mulf %4, %6 : vector<1x256xf32>
    %8 = arith.addf %3, %7 : vector<1x256xf32>
    %c2 = arith.constant 2 : index
    %c0_4 = arith.constant 0 : index
    %9 = vector.load %arg3[%c2, %c0_4] : memref<6x256xf32, #tpu.memory_space<vmem>>, vector<1x256xf32>
    %c2_5 = arith.constant 2 : index
    %10 = memref.load %arg1[%c2_5] : memref<12xf32, #tpu.memory_space<smem>>
    %11 = vector.broadcast %10 : f32 to vector<1x256xf32>
    %12 = arith.mulf %9, %11 : vector<1x256xf32>
    %13 = arith.addf %8, %12 : vector<1x256xf32>
    %c3 = arith.constant 3 : index
    %c0_6 = arith.constant 0 : index
    %14 = vector.load %arg3[%c3, %c0_6] : memref<6x256xf32, #tpu.memory_space<vmem>>, vector<1x256xf32>
    %c3_7 = arith.constant 3 : index
    %15 = memref.load %arg1[%c3_7] : memref<12xf32, #tpu.memory_space<smem>>
    %16 = vector.broadcast %15 : f32 to vector<1x256xf32>
    %17 = arith.mulf %14, %16 : vector<1x256xf32>
    %18 = arith.addf %13, %17 : vector<1x256xf32>
    %c4 = arith.constant 4 : index
    %c0_8 = arith.constant 0 : index
    %19 = vector.load %arg3[%c4, %c0_8] : memref<6x256xf32, #tpu.memory_space<vmem>>, vector<1x256xf32>
    %c4_9 = arith.constant 4 : index
    %20 = memref.load %arg1[%c4_9] : memref<12xf32, #tpu.memory_space<smem>>
    %21 = vector.broadcast %20 : f32 to vector<1x256xf32>
    %22 = arith.mulf %19, %21 : vector<1x256xf32>
    %23 = arith.addf %18, %22 : vector<1x256xf32>
    %c5 = arith.constant 5 : index
    %c0_10 = arith.constant 0 : index
    %24 = vector.load %arg3[%c5, %c0_10] : memref<6x256xf32, #tpu.memory_space<vmem>>, vector<1x256xf32>
    %c5_11 = arith.constant 5 : index
    %25 = memref.load %arg1[%c5_11] : memref<12xf32, #tpu.memory_space<smem>>
    %26 = vector.broadcast %25 : f32 to vector<1x256xf32>
    %27 = arith.mulf %24, %26 : vector<1x256xf32>
    %28 = arith.addf %23, %27 : vector<1x256xf32>
    %c0_12 = arith.constant 0 : index
    %29 = memref.load %arg2[%c0_12] : memref<2xf32, #tpu.memory_space<smem>>
    %30 = vector.broadcast %29 : f32 to vector<1x256xf32>
    %31 = arith.addf %28, %30 : vector<1x256xf32>
    %32 = arith.negf %31 : vector<1x256xf32>
    %33 = math.exp %32 : vector<1x256xf32>
    %cst = arith.constant 1.000000e+00 : f32
    %34 = vector.broadcast %cst : f32 to vector<1x256xf32>
    %35 = arith.addf %34, %33 : vector<1x256xf32>
    %36 = arith.divf %34, %35 : vector<1x256xf32>
    %c0_13 = arith.constant 0 : index
    %c0_14 = arith.constant 0 : index
    %37 = vector.load %arg4[%c0_13, %c0_14] : memref<2x256xf32, #tpu.memory_space<vmem>>, vector<1x256xf32>
    tpu.vector_store %arg4[%c0_13, %c0_14], %36 {strides = array<i32>} : memref<2x256xf32, #tpu.memory_space<vmem>>, vector<1x256xf32>,
    %c0_15 = arith.constant 0 : index
    %c0_16 = arith.constant 0 : index
    %38 = vector.load %arg3[%c0_15, %c0_16] : memref<6x256xf32, #tpu.memory_space<vmem>>, vector<1x256xf32>
    %c6 = arith.constant 6 : index
    %39 = memref.load %arg1[%c6] : memref<12xf32, #tpu.memory_space<smem>>
    %40 = vector.broadcast %39 : f32 to vector<1x256xf32>
    %41 = arith.mulf %38, %40 : vector<1x256xf32>
    %c1_17 = arith.constant 1 : index
    %c0_18 = arith.constant 0 : index
    %42 = vector.load %arg3[%c1_17, %c0_18] : memref<6x256xf32, #tpu.memory_space<vmem>>, vector<1x256xf32>
    %c7 = arith.constant 7 : index
    %43 = memref.load %arg1[%c7] : memref<12xf32, #tpu.memory_space<smem>>
    %44 = vector.broadcast %43 : f32 to vector<1x256xf32>
    %45 = arith.mulf %42, %44 : vector<1x256xf32>
    %46 = arith.addf %41, %45 : vector<1x256xf32>
    %c2_19 = arith.constant 2 : index
    %c0_20 = arith.constant 0 : index
    %47 = vector.load %arg3[%c2_19, %c0_20] : memref<6x256xf32, #tpu.memory_space<vmem>>, vector<1x256xf32>
    %c8 = arith.constant 8 : index
    %48 = memref.load %arg1[%c8] : memref<12xf32, #tpu.memory_space<smem>>
    %49 = vector.broadcast %48 : f32 to vector<1x256xf32>
    %50 = arith.mulf %47, %49 : vector<1x256xf32>
    %51 = arith.addf %46, %50 : vector<1x256xf32>
    %c3_21 = arith.constant 3 : index
    %c0_22 = arith.constant 0 : index
    %52 = vector.load %arg3[%c3_21, %c0_22] : memref<6x256xf32, #tpu.memory_space<vmem>>, vector<1x256xf32>
    %c9 = arith.constant 9 : index
    %53 = memref.load %arg1[%c9] : memref<12xf32, #tpu.memory_space<smem>>
    %54 = vector.broadcast %53 : f32 to vector<1x256xf32>
    %55 = arith.mulf %52, %54 : vector<1x256xf32>
    %56 = arith.addf %51, %55 : vector<1x256xf32>
    %c4_23 = arith.constant 4 : index
    %c0_24 = arith.constant 0 : index
    %57 = vector.load %arg3[%c4_23, %c0_24] : memref<6x256xf32, #tpu.memory_space<vmem>>, vector<1x256xf32>
    %c10 = arith.constant 10 : index
    %58 = memref.load %arg1[%c10] : memref<12xf32, #tpu.memory_space<smem>>
    %59 = vector.broadcast %58 : f32 to vector<1x256xf32>
    %60 = arith.mulf %57, %59 : vector<1x256xf32>
    %61 = arith.addf %56, %60 : vector<1x256xf32>
    %c5_25 = arith.constant 5 : index
    %c0_26 = arith.constant 0 : index
    %62 = vector.load %arg3[%c5_25, %c0_26] : memref<6x256xf32, #tpu.memory_space<vmem>>, vector<1x256xf32>
    %c11 = arith.constant 11 : index
    %63 = memref.load %arg1[%c11] : memref<12xf32, #tpu.memory_space<smem>>
    %64 = vector.broadcast %63 : f32 to vector<1x256xf32>
    %65 = arith.mulf %62, %64 : vector<1x256xf32>
    %66 = arith.addf %61, %65 : vector<1x256xf32>
    %c1_27 = arith.constant 1 : index
    %67 = memref.load %arg2[%c1_27] : memref<2xf32, #tpu.memory_space<smem>>
    %68 = vector.broadcast %67 : f32 to vector<1x256xf32>
    %69 = arith.addf %66, %68 : vector<1x256xf32>
    %70 = arith.negf %69 : vector<1x256xf32>
    %71 = math.exp %70 : vector<1x256xf32>
    %cst_28 = arith.constant 1.000000e+00 : f32
    %72 = vector.broadcast %cst_28 : f32 to vector<1x256xf32>
    %73 = arith.addf %72, %71 : vector<1x256xf32>
    %74 = arith.divf %72, %73 : vector<1x256xf32>
    %c1_29 = arith.constant 1 : index
    %c0_30 = arith.constant 0 : index
    %75 = vector.load %arg4[%c1_29, %c0_30] : memref<2x256xf32, #tpu.memory_space<vmem>>, vector<1x256xf32>
    tpu.vector_store %arg4[%c1_29, %c0_30], %74 {strides = array<i32>} : memref<2x256xf32, #tpu.memory_space<vmem>>, vector<1x256xf32>,
    return
  }
  func.func @transform_0(%arg0: i32, %arg1: memref<12xf32, #tpu.memory_space<smem>>, %arg2: memref<2xf32, #tpu.memory_space<smem>>) -> (i32, i32) {
    %c0_i32 = arith.constant 0 : i32
    %c0_i32_0 = arith.constant 0 : i32
    return %c0_i32, %arg0 : i32, i32
  }
  func.func @transform_1(%arg0: i32, %arg1: memref<12xf32, #tpu.memory_space<smem>>, %arg2: memref<2xf32, #tpu.memory_space<smem>>) -> (i32, i32) {
    %c0_i32 = arith.constant 0 : i32
    %c0_i32_0 = arith.constant 0 : i32
    return %c0_i32, %arg0 : i32, i32
  }
}

</mosaic_0001>

<llo_original>
// kernel: tpu_custom_call.1
$region0: #{tpu_custom_call.1}
  #allocation0 [shape = 'u32[]', space=smem, size = 0x4, offset = 0x4, fixed_abs, tag = 'smem constant byte address 0x4 - core index']
  #allocation1 [shape = 'u32[72,128]{1,0:T(1,128)}', space=vmem, size = 0x9000, scoped, tag = 'internal scratch']
  #allocation2 [shape = 's32[1]{0}', space=sflag, size = 0x4, scoped, tag = 'scoped memory for tpu_custom_call.1']
  #allocation3 [shape = 'u8[512]{0}', space=smem, size = 0x200, scoped, tag = 'prefetched SMEM operand 0']
  #allocation4 [shape = 'u8[512]{0}', space=smem, size = 0x200, scoped, tag = 'prefetched SMEM operand 1']
  %s0 = inlined_call_operand.hbm [shape: f32[12], index: 0, kind: input, shape index: {}]
  %s1 = inlined_call_operand.hbm [shape: f32[2], index: 1, kind: input, shape index: {}]
  %s2 = inlined_call_operand.hbm [shape: f32[6,256], index: 2, kind: input, shape index: {}]
  %s3 = inlined_call_operand.hbm [shape: f32[2,256], index: 3, kind: output, shape index: {}]
  %s4 = sld [smem:[#allocation0]]
  $region18: #{tpu_custom_call.1} parent=0
    _
  %s6 = ssub.s32 1, %s4
  %s7 = scalar_select 0, %s6, %s4
  %s9 = sshll.u32 %s0, 4
  %s10 = int_to_ptr.hbm [resolvable:$true] %s9
  %12 = dma.hbm_to_smem %s10, 16, [#allocation3], [#allocation2]
  %s14 = sshll.u32 %s1, 4
  %s15 = int_to_ptr.hbm [resolvable:$true] %s14
  %17 = dma.hbm_to_smem %s15, 16, [#allocation4], [#allocation2]
  %19 = dma.done [#allocation2], 32
  %20 = sfence
  $region1: #{tpu_custom_call.1} parent=0
    #allocation5 [shape = 'u8[8192]{0}', space=vmem, size = 0x2000, scoped, tag = 'input window, operand 2, single buffered']
    #allocation6 [shape = 's32[1]{0}', space=sflag, size = 0x4, scoped, tag = 'scoped memory for tpu_custom_call.1']
    #allocation7 [shape = 's32[1]{0}', space=sflag, size = 0x4, scoped, tag = 'scoped memory for tpu_custom_call.1']
    #allocation8 [shape = 'u8[2048]{0}', space=vmem, size = 0x800, scoped, tag = 'output window, operand 0, single buffered']
    %21 = vsyncpa [#allocation6], 0
    %22 = vsyncpa [#allocation7], 0
    // Predicated region
    $region2: #{tpu_custom_call.1} parent=1 // pred_check
      _
    $region3: #{tpu_custom_call.1} parent=1 // pred_check_branch
      %24 = sbr.rel (0) target = $region5
    $region4: #{tpu_custom_call.1} parent=1 // pred_region
      %26 = vsyncadd [#allocation6], 0
      %s28 = sshll.u32 %s2, 4
      %s29 = int_to_ptr.hbm [resolvable:$true] %s28
      %s30 = sshll.u32 [#allocation5], 4
      %s31 = int_to_ptr.vmem [resolvable:$true] %s30
      %33 = dma.hbm_to_vmem [thread:$0]  %s29, 256, %s31, [#allocation6]
    $region5: #{tpu_custom_call.1} parent=1 // pred_fallthru
      _
    // Predicated region
    $region6: #{tpu_custom_call.1} parent=1 // pred_check
      _
    $region7: #{tpu_custom_call.1} parent=1 // pred_check_branch
      %35 = sbr.rel (0) target = $region9
    $region8: #{tpu_custom_call.1} parent=1 // pred_region
      %37 = dma.done [#allocation6], 256
    $region9: #{tpu_custom_call.1} parent=1 // pred_fallthru
      _
    %v38 = vld [vmem:[#allocation5] ss:$8 sm:$0x3]
    %s39 = sld [smem:[#allocation3]]
    %v40 = vstv %s39
    %v41 = vmul.f32 %v38, %v40
    %s42 = scalar_lea.vmem [#allocation5], 1
    %v43 = vld [vmem:[%s42] ss:$8 sm:$0x3]
    %s44 = sld [smem:[#allocation3 + $0x1]]
    %v45 = vstv %s44
    %v46 = vmul.f32 %v43, %v45
    %v47 = vadd.f32 %v41, %v46
    %s48 = scalar_lea.vmem [#allocation5], 2
    %v49 = vld [vmem:[%s48] ss:$8 sm:$0x3]
    %s50 = sld [smem:[#allocation3 + $0x2]]
    %v51 = vstv %s50
    %v52 = vmul.f32 %v49, %v51
    %v53 = vadd.f32 %v47, %v52
    %s54 = scalar_lea.vmem [#allocation5], 3
    %v55 = vld [vmem:[%s54] ss:$8 sm:$0x3]
    %s56 = sld [smem:[#allocation3 + $0x3]]
    %v57 = vstv %s56
    %v58 = vmul.f32 %v55, %v57
    %v59 = vadd.f32 %v53, %v58
    %s60 = scalar_lea.vmem [#allocation5], 4
    %v61 = vld [vmem:[%s60] ss:$8 sm:$0x3]
    %s62 = sld [smem:[#allocation3 + $0x4]]
    %v63 = vstv %s62
    %v64 = vmul.f32 %v61, %v63
    %v65 = vadd.f32 %v59, %v64
    %s66 = scalar_lea.vmem [#allocation5], 5
    %v67 = vld [vmem:[%s66] ss:$8 sm:$0x3]
    %s68 = sld [smem:[#allocation3 + $0x5]]
    %v69 = vstv %s68
    %v70 = vmul.f32 %v67, %v69
    %v71 = vadd.f32 %v65, %v70
    %s72 = sld [smem:[#allocation4]]
    %v73 = vstv %s72
    %v74 = vadd.f32 %v71, %v73
    %v75 = vxor.u32 %v74, 2147483648
    %v76 = vmul.f32 %v75, 1.442695
    %v77 = vpow.pop %v76
    %v78 = vadd.f32 %v77, 1.0
    %v79 = vrcp.pop %v78
    %v80 = vmul.f32 %v78, %v79
    %v81 = vsub.f32 1.0, %v80
    %v82 = vmul.f32 %v79, %v81
    %v83 = vadd.f32 %v79, %v82
    %vm84 = vweird.f32 %v78
    %vm85 = vweird.f32 %v79
    %vm86 = vmor %vm84, %vm85
    %v87 = vsel %vm86, %v79, %v83
    %v88 = vand.u32 2147483647, %v78
    %vm89 = vcmp.eq.f32.partialorder %v88, 8.507059e+37
    %v90 = vand.u32 %v78, 2147483648
    %v91 = vor.u32 1.1754944e-38, %v90
    %v92 = vsel %vm89, %v91, %v87
    %v93 = vmul.f32 1.0, %v92
    %v94 = vlaneseq
    %vm95 = vcmp.ge.s32.totalorder %v94, 0
    %vm96 = vcmp.lt.s32.totalorder %v94, 256
    %vm97 = vmand %vm95, %vm96
    %98 = vst.msk [vmem:[#allocation8] ss:$2 sm:$0x3] %vm97, %v93
    %v99 = vld [vmem:[#allocation5] ss:$8 sm:$0x3]
    %s100 = sld [smem:[#allocation3 + $0x6]]
    %v101 = vstv %s100
    %v102 = vmul.f32 %v99, %v101
    %v103 = vld [vmem:[%s42] ss:$8 sm:$0x3]
    %s104 = sld [smem:[#allocation3 + $0x7]]
    %v105 = vstv %s104
    %v106 = vmul.f32 %v103, %v105
    %v107 = vadd.f32 %v102, %v106
    %v108 = vld [vmem:[%s48] ss:$8 sm:$0x3]
    %s109 = sld [smem:[#allocation3 + $0x8]]
    %v110 = vstv %s109
    %v111 = vmul.f32 %v108, %v110
    %v112 = vadd.f32 %v107, %v111
    %v113 = vld [vmem:[%s54] ss:$8 sm:$0x3]
    %s114 = sld [smem:[#allocation3 + $0x9]]
    %v115 = vstv %s114
    %v116 = vmul.f32 %v113, %v115
    %v117 = vadd.f32 %v112, %v116
    %v118 = vld [vmem:[%s60] ss:$8 sm:$0x3]
    %s119 = sld [smem:[#allocation3 + $0xa]]
    %v120 = vstv %s119
    %v121 = vmul.f32 %v118, %v120
    %v122 = vadd.f32 %v117, %v121
    %v123 = vld [vmem:[%s66] ss:$8 sm:$0x3]
    %s124 = sld [smem:[#allocation3 + $0xb]]
    %v125 = vstv %s124
    %v126 = vmul.f32 %v123, %v125
    %v127 = vadd.f32 %v122, %v126
    %s128 = sld [smem:[#allocation4 + $0x1]]
    %v129 = vstv %s128
    %v130 = vadd.f32 %v127, %v129
    %v131 = vxor.u32 %v130, 2147483648
    %v132 = vmul.f32 %v131, 1.442695
    %v133 = vpow.pop %v132
    %v134 = vadd.f32 %v133, 1.0
    %v135 = vrcp.pop %v134
    %v136 = vmul.f32 %v134, %v135
    %v137 = vsub.f32 1.0, %v136
    %v138 = vmul.f32 %v135, %v137
    %v139 = vadd.f32 %v135, %v138
    %vm140 = vweird.f32 %v134
    %vm141 = vweird.f32 %v135
    %vm142 = vmor %vm140, %vm141
    %v143 = vsel %vm142, %v135, %v139
    %v144 = vand.u32 2147483647, %v134
    %vm145 = vcmp.eq.f32.partialorder %v144, 8.507059e+37
    %v146 = vand.u32 %v134, 2147483648
    %v147 = vor.u32 1.1754944e-38, %v146
    %v148 = vsel %vm145, %v147, %v143
    %v149 = vmul.f32 1.0, %v148
    %s150 = scalar_lea.vmem [#allocation8], 1
    %151 = vst.msk [vmem:[%s150] ss:$2 sm:$0x3] %vm97, %v149
    // Predicated region
    $region10: #{tpu_custom_call.1} parent=1 // pred_check
      _
    $region11: #{tpu_custom_call.1} parent=1 // pred_check_branch
      %153 = sbr.rel (0) target = $region13
    $region12: #{tpu_custom_call.1} parent=1 // pred_region
      %155 = vsyncadd [#allocation7], 0
      %s157 = sshll.u32 [#allocation8], 4
      %s158 = int_to_ptr.vmem [resolvable:$true] %s157
      %s159 = sshll.u32 %s3, 4
      %s160 = int_to_ptr.hbm [resolvable:$true] %s159
      %162 = dma.vmem_to_hbm [thread:$0]  %s158, 64, %s160, [#allocation7]
    $region13: #{tpu_custom_call.1} parent=1 // pred_fallthru
      _
    // Predicated region
    $region14: #{tpu_custom_call.1} parent=1 // pred_check
      _
    $region15: #{tpu_custom_call.1} parent=1 // pred_check_branch
      %164 = sbr.rel (0) target = $region17
    $region16: #{tpu_custom_call.1} parent=1 // pred_region
      %166 = dma.done [#allocation7], 64
    $region17: #{tpu_custom_call.1} parent=1 // pred_fallthru
      _
    %167 = vsyncpa [#allocation6], 1
    %168 = vsyncpa [#allocation7], 1

</llo_original>
